<compile_context>
chip_gen: v7x
topology: tpu7x:2x2x1
jax: 0.10.0
libtpu: 0.0.40
codegen_flags: <defaults>
</compile_context>

<pallas_src>
import functools

import jax
import jax.numpy as jnp
from jax.experimental import pallas as pl
from jax.experimental.pallas import tpu as pltpu


def _round_up(x, m):
    return (x + m - 1) // m * m


# -----------------------------------------------------------------------------
# Per-generation tuning: lane-tile ceiling and scoped-VMEM limit
# -----------------------------------------------------------------------------
@functools.lru_cache(maxsize=None)
def _tpu_tuning():
    kind = ""
    try:
        kind = jax.devices()[0].device_kind.lower()
    except Exception:
        pass
    if "v7" in kind:                      # 64 MiB VMEM per TensorCore: keep headroom
        return 16384, 48 * 1024 * 1024
    if "v5" in kind or "v6" in kind:      # 128 MiB physical VMEM
        return 32768, 96 * 1024 * 1024
    return 16384, 48 * 1024 * 1024        # conservative default (v4 / unknown)


def _pick_tile_m(m, tile_max):
    """Pick (tile_m, m_pad).  Prefer a tile that divides M exactly (no padding
    copy); fall back to padding only for small / ragged shapes."""
    limit = max(1, tile_max // 128)
    if m % 128 == 0:
        q = m // 128
        best = 1
        for cand in range(1, min(q, limit) + 1):
            if q % cand == 0:
                best = cand
        if q <= limit or best >= max(1, limit // 8):
            tile = 128 * best
            if tile == m and best % 2 == 0:   # give megacore >=2 grid steps when free
                tile //= 2
            return tile, m
    m128 = _round_up(m, 128)
    tile = min(tile_max, m128)
    return tile, _round_up(m128, tile)


# -----------------------------------------------------------------------------
# Pallas kernel: out(R, TILE_M) = W(R, K) @ P(K, TILE_M) + bias (+ReLU) (+atan2)
# -----------------------------------------------------------------------------
def _conv_matmul_kernel(w_ref, b_ref, p_ref, o_ref, *, relu, atan2):
    # bf16 operands, f32 accumulation on the MXU; epilogue stays f32.
    acc = jnp.dot(w_ref[...], p_ref[...], preferred_element_type=jnp.float32)
    acc = acc + b_ref[...]                       # (R, 1) broadcast along lanes
    if relu:                                     # complex_relu == ReLU on re & im rows
        acc = jnp.maximum(acc, 0.0)
    if atan2:                                    # torch.atan2(out.real, out.imag)
        c = acc.shape[0] // 2
        acc = jnp.arctan2(acc[:c, :], acc[c:, :])
    o_ref[...] = acc.astype(o_ref.dtype)


def _pallas_conv_matmul(w_mat, bias, patches, *, relu, atan2, out_dtype):
    """w_mat: (R, K) bf16, bias: (R, 1) f32, patches: (K, M) bf16.
    Returns (R or R//2, M) in `out_dtype`."""
    rows_w, k = w_mat.shape
    m = patches.shape[1]
    out_rows = rows_w // 2 if atan2 else rows_w

    tile_max, vmem_limit = _tpu_tuning()
    tile_m, m_pad = _pick_tile_m(m, tile_max)
    if m_pad != m:          # only small / ragged deep layers hit this path
        patches = jnp.pad(patches, ((0, 0), (0, m_pad - m)))

    kernel = functools.partial(_conv_matmul_kernel, relu=relu, atan2=atan2)
    cost = pl.CostEstimate(
        flops=int(2 * rows_w * k * m_pad),
        transcendentals=int(out_rows * m_pad) if atan2 else 0,
        bytes_accessed=int(k * m_pad * 2 + rows_w * k * 2
                           + out_rows * m_pad * jnp.dtype(out_dtype).itemsize),
    )
    out = pl.pallas_call(
        kernel,
        out_shape=jax.ShapeDtypeStruct((out_rows, m_pad), out_dtype),
        grid=(m_pad // tile_m,),
        in_specs=[
            pl.BlockSpec((rows_w, k), lambda i: (0, 0)),   # weight, VMEM-resident
            pl.BlockSpec((rows_w, 1), lambda i: (0, 0)),   # bias,   VMEM-resident
            pl.BlockSpec((k, tile_m), lambda i: (0, i)),   # patch tile (lane-dense)
        ],
        out_specs=pl.BlockSpec((out_rows, tile_m), lambda i: (0, i)),
        compiler_params=pltpu.CompilerParams(
            dimension_semantics=("parallel",),
            vmem_limit_bytes=vmem_limit),
        cost_estimate=cost,
    )(w_mat, bias, patches)
    if m_pad != m:
        out = out[:, :m]
    return out


# -----------------------------------------------------------------------------
# Static capability check for in-kernel atan2 (no try/except around jitted fwd)
# -----------------------------------------------------------------------------
@functools.lru_cache(maxsize=None)
def _atan2_in_kernel_supported():
    def _probe(x_ref, o_ref):
        o_ref[...] = jnp.arctan2(x_ref[...], x_ref[...])
    try:
        out = pl.pallas_call(
            _probe,
            out_shape=jax.ShapeDtypeStruct((8, 128), jnp.float32),
            in_specs=[pl.BlockSpec(memory_space=pltpu.MemorySpace.VMEM)],
            out_specs=pl.BlockSpec(memory_space=pltpu.MemorySpace.VMEM),
        )(jnp.ones((8, 128), jnp.float32))
        jax.block_until_ready(out)
        return True
    except Exception:
        return False


# -----------------------------------------------------------------------------
# Glue: channel-major im2col (pure data movement, stays in XLA for now)
# -----------------------------------------------------------------------------
def _im2col_cmajor(x, ksz, stride, pad):
    """x: (C, N, H, W) -> patches (ksz*ksz*C, N*OH*OW) bf16, K order (kh, kw, c)."""
    c, n, h, w = x.shape
    xp = jnp.pad(x, ((0, 0), (0, 0), (pad, pad), (pad, pad)))
    oh = (h + 2 * pad - ksz) // stride + 1
    ow = (w + 2 * pad - ksz) // stride + 1
    cols = []
    for kh in range(ksz):
        for kw in range(ksz):
            cols.append(xp[:, :, kh:kh + (oh - 1) * stride + 1:stride,
                           kw:kw + (ow - 1) * stride + 1:stride])
    patches = jnp.stack(cols, axis=0).reshape(ksz * ksz * c, n * oh * ow)
    return patches.astype(jnp.bfloat16), (n, oh, ow)


# -----------------------------------------------------------------------------
# Complex conv layers (Down4 / Up4 / Up5 equivalents), channel-major layout
# -----------------------------------------------------------------------------
def complex_conv_down(x, layer):
    """ComplexConv2d(3x3, stride 2, pad 1) + complex ReLU.
    x: (2Cin, N, H, W) bf16 -> (2Cout, N, H/2, W/2) bf16."""
    w_mat, bias = layer
    patches, (n, oh, ow) = _im2col_cmajor(x, 3, stride=2, pad=1)
    out = _pallas_conv_matmul(w_mat, bias, patches, relu=True, atan2=False,
                              out_dtype=jnp.bfloat16)
    return out.reshape(w_mat.shape[0], n, oh, ow)


def complex_conv_up(x, layer, *, relu, atan2=False):
    """ComplexConvTranspose2d(4x4, stride 2, pad 1), all four output parities
    merged into ONE 3x3/stride-1 matmul, followed by a depth-to-space reshape.
    x: (2Cin, N, H, W) -> (2Cout, N, 2H, 2W) bf16  [or (Cout, N, 2H, 2W) f32
    when atan2=True, i.e. the final phase layer]."""
    w_mat, bias = layer
    _, n, h, w = x.shape
    rows_full = bias.shape[0]                 # 4 * 2Cout (parity-packed rows)
    patches, _ = _im2col_cmajor(x, 3, stride=1, pad=1)      # (9*2Cin, N*H*W)
    atan2_in_kernel = atan2 and _atan2_in_kernel_supported()
    out_dtype = jnp.float32 if atan2 else jnp.bfloat16
    out = _pallas_conv_matmul(w_mat, bias, patches, relu=relu,
                              atan2=atan2_in_kernel, out_dtype=out_dtype)
    if atan2 and not atan2_in_kernel:
        half = rows_full // 2
        out = jnp.arctan2(out[:half], out[half:])
    c = out.shape[0] // 4                     # channels after optional atan2
    # depth-to-space: rows are ordered r = c*4 + py*2 + px
    out = out.reshape(c, 2, 2, n, h, w)
    out = jnp.transpose(out, (0, 3, 4, 1, 5, 2)).reshape(c, n, 2 * h, 2 * w)
    return out


# -----------------------------------------------------------------------------
# One-time weight folding (complex -> real block weights, matmul-ready, bf16)
# -----------------------------------------------------------------------------
def fold_down_layer(wr, wi, br, bi):
    # wr, wi: (Cout, Cin, 3, 3) torch Conv2d layout
    cout = wr.shape[0]
    top = jnp.concatenate([wr, -wi], axis=1)            # real-output rows
    bot = jnp.concatenate([wi, wr], axis=1)             # imag-output rows
    wb = jnp.concatenate([top, bot], axis=0)            # (2Cout, 2Cin, 3, 3)
    w_mat = jnp.transpose(wb, (0, 2, 3, 1)).reshape(2 * cout, -1)
    bias = jnp.concatenate([br - bi, br + bi]).reshape(2 * cout, 1)
    return w_mat.astype(jnp.bfloat16), bias.astype(jnp.float32)


def fold_up_layer(wr, wi, br, bi):
    """Parity-merged fold of ComplexConvTranspose2d(4x4, stride 2, pad 1).
    Output row r = c2*4 + py*2 + px over a 3x3/stride-1 im2col of the input:
    for parity p, tap dy uses kernel row kh with mapping
      p=0: dy=0 -> kh=3, dy=1 -> kh=1 ;  p=1: dy=1 -> kh=2, dy=2 -> kh=0
    (derived from o = 2*i - pad + k), and the same mapping for px/dx/kw."""
    cin, cout = wr.shape[0], wr.shape[1]
    cin2, cout2 = 2 * cin, 2 * cout
    left = jnp.concatenate([wr, -wi], axis=0)            # inputs -> real outputs
    right = jnp.concatenate([wi, wr], axis=0)            # inputs -> imag outputs
    wb = jnp.concatenate([left, right], axis=1)          # (2Cin, 2Cout, 4, 4)
    tap = {(0, 0): 3, (0, 1): 1, (1, 1): 2, (1, 2): 0}   # (parity, d) -> kernel idx
    w4 = jnp.zeros((cout2, 2, 2, 3, 3, cin2), jnp.float32)  # (c2, py, px, dy, dx, cin2)
    for (py, dy), kh in tap.items():
        for (px, dx), kw in tap.items():
            w4 = w4.at[:, py, px, dy, dx, :].set(wb[:, :, kh, kw].T)
    w_mat = w4.reshape(cout2 * 4, 9 * cin2).astype(jnp.bfloat16)
    bias_c2 = jnp.concatenate([br - bi, br + bi])        # (2Cout,) [real; imag]
    bias = jnp.repeat(bias_c2, 4).reshape(cout2 * 4, 1).astype(jnp.float32)
    return w_mat, bias


def fold_params(params):
    return {
        "down1": fold_down_layer(*params["down1"]),
        "down2": fold_down_layer(*params["down2"]),
        "down3": fold_down_layer(*params["down3"]),
        "up3": fold_up_layer(*params["up3"]),
        "up2": fold_up_layer(*params["up2"]),
        "up1": fold_up_layer(*params["up1"]),
    }


# -----------------------------------------------------------------------------
# Deterministic parameter init (same shapes as the torch module's __init__)
# -----------------------------------------------------------------------------
def _init_complex_pair(key, w_shape, cout):
    kwr, kwi, kbr, kbi = jax.random.split(key, 4)
    fan = w_shape[1] * w_shape[2] * w_shape[3]
    bound = 1.0 / (fan ** 0.5)
    wr = jax.random.uniform(kwr, w_shape, jnp.float32, -bound, bound)
    wi = jax.random.uniform(kwi, w_shape, jnp.float32, -bound, bound)
    br = jax.random.uniform(kbr, (cout,), jnp.float32, -bound, bound)
    bi = jax.random.uniform(kbi, (cout,), jnp.float32, -bound, bound)
    return wr, wi, br, bi


def init_params(key):
    keys = jax.random.split(key, 6)
    return {
        # Down4: ComplexConv2d(in, out, 3, stride=2, padding=1) -> (out, in, 3, 3)
        "down1": _init_complex_pair(keys[0], (2, 1, 3, 3), 2),
        "down2": _init_complex_pair(keys[1], (4, 2, 3, 3), 4),
        "down3": _init_complex_pair(keys[2], (8, 4, 3, 3), 8),
        # Up4/Up5: ComplexConvTranspose2d(in, out, 4, stride=2, pad=1) -> (in, out, 4, 4)
        "up3": _init_complex_pair(keys[3], (8, 4, 4, 4), 4),
        "up2": _init_complex_pair(keys[4], (4, 2, 4, 4), 2),
        "up1": _init_complex_pair(keys[5], (2, 1, 4, 4), 1),
    }


# -----------------------------------------------------------------------------
# net6 forward
# -----------------------------------------------------------------------------
def net6_forward(xc, folded):
    # xc: complex64, NCHW (N, 1, H, W) like the torch module input
    xr = jnp.real(xc).astype(jnp.float32)
    xi = jnp.imag(xc).astype(jnp.float32)
    x = jnp.concatenate([xr, xi], axis=1)                  # (N, 2, H, W)
    x = jnp.transpose(x, (1, 0, 2, 3)).astype(jnp.bfloat16)  # channel-major bf16

    out1 = complex_conv_down(x, folded["down1"])           # (4,  N, H/2, W/2)
    out2 = complex_conv_down(out1, folded["down2"])        # (8,  N, H/4, W/4)
    out3 = complex_conv_down(out2, folded["down3"])        # (16, N, H/8, W/8)

    out18 = complex_conv_up(out3, folded["up3"], relu=True)    # (8, N, H/4, W/4)
    # out18 + out2 : f32 add fused by XLA into the depth-to-space output pass
    s18 = (out18.astype(jnp.float32) + out2.astype(jnp.float32)).astype(jnp.bfloat16)

    out19 = complex_conv_up(s18, folded["up2"], relu=True)     # (4, N, H/2, W/2)
    s19 = (out19.astype(jnp.float32) + out1.astype(jnp.float32)).astype(jnp.bfloat16)

    # Up5 (no ReLU) + atan2(real, imag) epilogue -> (1, N, H, W) f32
    holo = complex_conv_up(s19, folded["up1"], relu=False, atan2=True)
    # torch.squeeze(out20): drops ALL size-1 dims (batch axis too when N == 1)
    return jnp.squeeze(holo)


if __name__ == "__main__":
    key = jax.random.PRNGKey(0)
    k_xr, k_xi, k_p = jax.random.split(key, 3)

    N, H, W = 2, 16, 16  # small shapes; spatial divisible by 8 (3 downsamples)
    xr = jax.random.normal(k_xr, (N, 1, H, W), jnp.float32)
    xi = jax.random.normal(k_xi, (N, 1, H, W), jnp.float32)
    xc = (xr + 1j * xi).astype(jnp.complex64)

    params = init_params(k_p)
    folded = fold_params(params)            # fold complex weights once, outside jit
    _ = _atan2_in_kernel_supported()        # warm the static capability probe
    _ = _tpu_tuning()                       # warm the generation query

    fwd = jax.jit(net6_forward)
    holophase = jax.block_until_ready(fwd(xc, folded))

    assert holophase.shape == (N, H, W), holophase.shape
    assert holophase.dtype == jnp.float32
    print("KERNEL_OK")
</pallas_src>

<mosaic_0001>
module attributes {stable_mosaic.version = 11 : i64} {
  func.func @_probe(%arg0: memref<8x128xf32, #tpu.memory_space<vmem>>, %arg1: memref<8x128xf32, #tpu.memory_space<vmem>>) attributes {dimension_semantics = [], scalar_prefetch = 0 : i64, scratch_operands = 0 : i64, tpu.core_type = #tpu.core_type<tc>} {
    %c0 = arith.constant 0 : index
    %c0_0 = arith.constant 0 : index
    %0 = vector.load %arg0[%c0, %c0_0] : memref<8x128xf32, #tpu.memory_space<vmem>>, vector<8x128xf32>
    %c0_1 = arith.constant 0 : index
    %c0_2 = arith.constant 0 : index
    %1 = vector.load %arg0[%c0_1, %c0_2] : memref<8x128xf32, #tpu.memory_space<vmem>>, vector<8x128xf32>
    %2 = math.atan2 %0, %1 : vector<8x128xf32>
    %c0_3 = arith.constant 0 : index
    %c0_4 = arith.constant 0 : index
    %3 = vector.load %arg1[%c0_3, %c0_4] : memref<8x128xf32, #tpu.memory_space<vmem>>, vector<8x128xf32>
    tpu.vector_store %arg1[%c0_3, %c0_4], %2 {strides = array<i32>} : memref<8x128xf32, #tpu.memory_space<vmem>>, vector<8x128xf32>,
    return
  }
}

module attributes {stable_mosaic.version = 11 : i64} {
  func.func @_conv_matmul_kernel(%arg0: i32, %arg1: memref<4x18xbf16, #tpu.memory_space<vmem>>, %arg2: memref<4x1xf32, #tpu.memory_space<vmem>>, %arg3: memref<18x128xbf16, #tpu.memory_space<vmem>>, %arg4: memref<4x128xbf16, #tpu.memory_space<vmem>>) attributes {dimension_semantics = [#tpu.dimension_semantics<parallel>], iteration_bounds = array<i64: 1>, scalar_prefetch = 0 : i64, scratch_operands = 0 : i64, tpu.core_type = #tpu.core_type<tc>, window_params = [{pipeline_mode = #tpu.pipeline_mode<synchronous>, transform_indices = @transform_0, window_bounds = array<i64: 4, 18>}, {pipeline_mode = #tpu.pipeline_mode<synchronous>, transform_indices = @transform_1, window_bounds = array<i64: 4, 1>}, {transform_indices = @transform_2, window_bounds = array<i64: 18, 128>}, {transform_indices = @transform_3, window_bounds = array<i64: 4, 128>}]} {
    %c0 = arith.constant 0 : index
    %c0_0 = arith.constant 0 : index
    %0 = vector.load %arg1[%c0, %c0_0] : memref<4x18xbf16, #tpu.memory_space<vmem>>, vector<4x18xbf16>
    %c0_1 = arith.constant 0 : index
    %c0_2 = arith.constant 0 : index
    %1 = vector.load %arg3[%c0_1, %c0_2] : memref<18x128xbf16, #tpu.memory_space<vmem>>, vector<18x128xbf16>
    %cst = arith.constant dense<0.000000e+00> : vector<4x128xf32>
    %2 = tpu.matmul %0, %1, %cst {dimension_numbers = #tpu.dot_dimension_numbers<[1], [0], [0], [1], [0, 0, 1, 1], [], []>} : vector<4x18xbf16>, vector<18x128xbf16>, vector<4x128xf32> -> vector<4x128xf32>
    %c0_3 = arith.constant 0 : index
    %c0_4 = arith.constant 0 : index
    %3 = vector.load %arg2[%c0_3, %c0_4] : memref<4x1xf32, #tpu.memory_space<vmem>>, vector<4x1xf32>
    %4 = vector.broadcast %3 : vector<4x1xf32> to vector<4x128xf32>
    %5 = arith.addf %2, %4 : vector<4x128xf32>
    %cst_5 = arith.constant 0.000000e+00 : f32
    %6 = vector.broadcast %cst_5 : f32 to vector<4x128xf32>
    %7 = arith.maximumf %5, %6 : vector<4x128xf32>
    %8 = arith.truncf %7 : vector<4x128xf32> to vector<4x128xbf16>
    %c0_6 = arith.constant 0 : index
    %c0_7 = arith.constant 0 : index
    %9 = vector.load %arg4[%c0_6, %c0_7] : memref<4x128xbf16, #tpu.memory_space<vmem>>, vector<4x128xbf16>
    tpu.vector_store %arg4[%c0_6, %c0_7], %8 {strides = array<i32>} : memref<4x128xbf16, #tpu.memory_space<vmem>>, vector<4x128xbf16>,
    return
  }
  func.func @transform_0(%arg0: i32) -> (i32, i32) {
    %c0_i32 = arith.constant 0 : i32
    %c0_i32_0 = arith.constant 0 : i32
    %c0_i32_1 = arith.constant 0 : i32
    return %c0_i32, %c0_i32_0 : i32, i32
  }
  func.func @transform_1(%arg0: i32) -> (i32, i32) {
    %c0_i32 = arith.constant 0 : i32
    %c0_i32_0 = arith.constant 0 : i32
    %c0_i32_1 = arith.constant 0 : i32
    return %c0_i32, %c0_i32_0 : i32, i32
  }
  func.func @transform_2(%arg0: i32) -> (i32, i32) {
    %c0_i32 = arith.constant 0 : i32
    %c0_i32_0 = arith.constant 0 : i32
    return %c0_i32, %arg0 : i32, i32
  }
  func.func @transform_3(%arg0: i32) -> (i32, i32) {
    %c0_i32 = arith.constant 0 : i32
    %c0_i32_0 = arith.constant 0 : i32
    return %c0_i32, %arg0 : i32, i32
  }
}

module attributes {stable_mosaic.version = 11 : i64} {
  func.func @_conv_matmul_kernel(%arg0: i32, %arg1: memref<8x36xbf16, #tpu.memory_space<vmem>>, %arg2: memref<8x1xf32, #tpu.memory_space<vmem>>, %arg3: memref<36x128xbf16, #tpu.memory_space<vmem>>, %arg4: memref<8x128xbf16, #tpu.memory_space<vmem>>) attributes {dimension_semantics = [#tpu.dimension_semantics<parallel>], iteration_bounds = array<i64: 1>, scalar_prefetch = 0 : i64, scratch_operands = 0 : i64, tpu.core_type = #tpu.core_type<tc>, window_params = [{pipeline_mode = #tpu.pipeline_mode<synchronous>, transform_indices = @transform_0, window_bounds = array<i64: 8, 36>}, {pipeline_mode = #tpu.pipeline_mode<synchronous>, transform_indices = @transform_1, window_bounds = array<i64: 8, 1>}, {transform_indices = @transform_2, window_bounds = array<i64: 36, 128>}, {transform_indices = @transform_3, window_bounds = array<i64: 8, 128>}]} {
    %c0 = arith.constant 0 : index
    %c0_0 = arith.constant 0 : index
    %0 = vector.load %arg1[%c0, %c0_0] : memref<8x36xbf16, #tpu.memory_space<vmem>>, vector<8x36xbf16>
    %c0_1 = arith.constant 0 : index
    %c0_2 = arith.constant 0 : index
    %1 = vector.load %arg3[%c0_1, %c0_2] : memref<36x128xbf16, #tpu.memory_space<vmem>>, vector<36x128xbf16>
    %cst = arith.constant dense<0.000000e+00> : vector<8x128xf32>
    %2 = tpu.matmul %0, %1, %cst {dimension_numbers = #tpu.dot_dimension_numbers<[1], [0], [0], [1], [0, 0, 1, 1], [], []>} : vector<8x36xbf16>, vector<36x128xbf16>, vector<8x128xf32> -> vector<8x128xf32>
    %c0_3 = arith.constant 0 : index
    %c0_4 = arith.constant 0 : index
    %3 = vector.load %arg2[%c0_3, %c0_4] : memref<8x1xf32, #tpu.memory_space<vmem>>, vector<8x1xf32>
    %4 = vector.broadcast %3 : vector<8x1xf32> to vector<8x128xf32>
    %5 = arith.addf %2, %4 : vector<8x128xf32>
    %cst_5 = arith.constant 0.000000e+00 : f32
    %6 = vector.broadcast %cst_5 : f32 to vector<8x128xf32>
    %7 = arith.maximumf %5, %6 : vector<8x128xf32>
    %8 = arith.truncf %7 : vector<8x128xf32> to vector<8x128xbf16>
    %c0_6 = arith.constant 0 : index
    %c0_7 = arith.constant 0 : index
    %9 = vector.load %arg4[%c0_6, %c0_7] : memref<8x128xbf16, #tpu.memory_space<vmem>>, vector<8x128xbf16>
    tpu.vector_store %arg4[%c0_6, %c0_7], %8 {strides = array<i32>} : memref<8x128xbf16, #tpu.memory_space<vmem>>, vector<8x128xbf16>,
    return
  }
  func.func @transform_0(%arg0: i32) -> (i32, i32) {
    %c0_i32 = arith.constant 0 : i32
    %c0_i32_0 = arith.constant 0 : i32
    %c0_i32_1 = arith.constant 0 : i32
    return %c0_i32, %c0_i32_0 : i32, i32
  }
  func.func @transform_1(%arg0: i32) -> (i32, i32) {
    %c0_i32 = arith.constant 0 : i32
    %c0_i32_0 = arith.constant 0 : i32
    %c0_i32_1 = arith.constant 0 : i32
    return %c0_i32, %c0_i32_0 : i32, i32
  }
  func.func @transform_2(%arg0: i32) -> (i32, i32) {
    %c0_i32 = arith.constant 0 : i32
    %c0_i32_0 = arith.constant 0 : i32
    return %c0_i32, %arg0 : i32, i32
  }
  func.func @transform_3(%arg0: i32) -> (i32, i32) {
    %c0_i32 = arith.constant 0 : i32
    %c0_i32_0 = arith.constant 0 : i32
    return %c0_i32, %arg0 : i32, i32
  }
}

module attributes {stable_mosaic.version = 11 : i64} {
  func.func @_conv_matmul_kernel(%arg0: i32, %arg1: memref<16x72xbf16, #tpu.memory_space<vmem>>, %arg2: memref<16x1xf32, #tpu.memory_space<vmem>>, %arg3: memref<72x128xbf16, #tpu.memory_space<vmem>>, %arg4: memref<16x128xbf16, #tpu.memory_space<vmem>>) attributes {dimension_semantics = [#tpu.dimension_semantics<parallel>], iteration_bounds = array<i64: 1>, scalar_prefetch = 0 : i64, scratch_operands = 0 : i64, tpu.core_type = #tpu.core_type<tc>, window_params = [{pipeline_mode = #tpu.pipeline_mode<synchronous>, transform_indices = @transform_0, window_bounds = array<i64: 16, 72>}, {pipeline_mode = #tpu.pipeline_mode<synchronous>, transform_indices = @transform_1, window_bounds = array<i64: 16, 1>}, {transform_indices = @transform_2, window_bounds = array<i64: 72, 128>}, {transform_indices = @transform_3, window_bounds = array<i64: 16, 128>}]} {
    %c0 = arith.constant 0 : index
    %c0_0 = arith.constant 0 : index
    %0 = vector.load %arg1[%c0, %c0_0] : memref<16x72xbf16, #tpu.memory_space<vmem>>, vector<16x72xbf16>
    %c0_1 = arith.constant 0 : index
    %c0_2 = arith.constant 0 : index
    %1 = vector.load %arg3[%c0_1, %c0_2] : memref<72x128xbf16, #tpu.memory_space<vmem>>, vector<72x128xbf16>
    %cst = arith.constant dense<0.000000e+00> : vector<16x128xf32>
    %2 = tpu.matmul %0, %1, %cst {dimension_numbers = #tpu.dot_dimension_numbers<[1], [0], [0], [1], [0, 0, 1, 1], [], []>} : vector<16x72xbf16>, vector<72x128xbf16>, vector<16x128xf32> -> vector<16x128xf32>
    %c0_3 = arith.constant 0 : index
    %c0_4 = arith.constant 0 : index
    %3 = vector.load %arg2[%c0_3, %c0_4] : memref<16x1xf32, #tpu.memory_space<vmem>>, vector<16x1xf32>
    %4 = vector.broadcast %3 : vector<16x1xf32> to vector<16x128xf32>
    %5 = arith.addf %2, %4 : vector<16x128xf32>
    %cst_5 = arith.constant 0.000000e+00 : f32
    %6 = vector.broadcast %cst_5 : f32 to vector<16x128xf32>
    %7 = arith.maximumf %5, %6 : vector<16x128xf32>
    %8 = arith.truncf %7 : vector<16x128xf32> to vector<16x128xbf16>
    %c0_6 = arith.constant 0 : index
    %c0_7 = arith.constant 0 : index
    %9 = vector.load %arg4[%c0_6, %c0_7] : memref<16x128xbf16, #tpu.memory_space<vmem>>, vector<16x128xbf16>
    tpu.vector_store %arg4[%c0_6, %c0_7], %8 {strides = array<i32>} : memref<16x128xbf16, #tpu.memory_space<vmem>>, vector<16x128xbf16>,
    return
  }
  func.func @transform_0(%arg0: i32) -> (i32, i32) {
    %c0_i32 = arith.constant 0 : i32
    %c0_i32_0 = arith.constant 0 : i32
    %c0_i32_1 = arith.constant 0 : i32
    return %c0_i32, %c0_i32_0 : i32, i32
  }
  func.func @transform_1(%arg0: i32) -> (i32, i32) {
    %c0_i32 = arith.constant 0 : i32
    %c0_i32_0 = arith.constant 0 : i32
    %c0_i32_1 = arith.constant 0 : i32
    return %c0_i32, %c0_i32_0 : i32, i32
  }
  func.func @transform_2(%arg0: i32) -> (i32, i32) {
    %c0_i32 = arith.constant 0 : i32
    %c0_i32_0 = arith.constant 0 : i32
    return %c0_i32, %arg0 : i32, i32
  }
  func.func @transform_3(%arg0: i32) -> (i32, i32) {
    %c0_i32 = arith.constant 0 : i32
    %c0_i32_0 = arith.constant 0 : i32
    return %c0_i32, %arg0 : i32, i32
  }
}

module attributes {stable_mosaic.version = 11 : i64} {
  func.func @_conv_matmul_kernel(%arg0: i32, %arg1: memref<32x144xbf16, #tpu.memory_space<vmem>>, %arg2: memref<32x1xf32, #tpu.memory_space<vmem>>, %arg3: memref<144x128xbf16, #tpu.memory_space<vmem>>, %arg4: memref<32x128xbf16, #tpu.memory_space<vmem>>) attributes {dimension_semantics = [#tpu.dimension_semantics<parallel>], iteration_bounds = array<i64: 1>, scalar_prefetch = 0 : i64, scratch_operands = 0 : i64, tpu.core_type = #tpu.core_type<tc>, window_params = [{pipeline_mode = #tpu.pipeline_mode<synchronous>, transform_indices = @transform_0, window_bounds = array<i64: 32, 144>}, {pipeline_mode = #tpu.pipeline_mode<synchronous>, transform_indices = @transform_1, window_bounds = array<i64: 32, 1>}, {transform_indices = @transform_2, window_bounds = array<i64: 144, 128>}, {transform_indices = @transform_3, window_bounds = array<i64: 32, 128>}]} {
    %c0 = arith.constant 0 : index
    %c0_0 = arith.constant 0 : index
    %0 = vector.load %arg1[%c0, %c0_0] : memref<32x144xbf16, #tpu.memory_space<vmem>>, vector<32x144xbf16>
    %c0_1 = arith.constant 0 : index
    %c0_2 = arith.constant 0 : index
    %1 = vector.load %arg3[%c0_1, %c0_2] : memref<144x128xbf16, #tpu.memory_space<vmem>>, vector<144x128xbf16>
    %cst = arith.constant dense<0.000000e+00> : vector<32x128xf32>
    %2 = tpu.matmul %0, %1, %cst {dimension_numbers = #tpu.dot_dimension_numbers<[1], [0], [0], [1], [0, 0, 1, 1], [], []>} : vector<32x144xbf16>, vector<144x128xbf16>, vector<32x128xf32> -> vector<32x128xf32>
    %c0_3 = arith.constant 0 : index
    %c0_4 = arith.constant 0 : index
    %3 = vector.load %arg2[%c0_3, %c0_4] : memref<32x1xf32, #tpu.memory_space<vmem>>, vector<32x1xf32>
    %4 = vector.broadcast %3 : vector<32x1xf32> to vector<32x128xf32>
    %5 = arith.addf %2, %4 : vector<32x128xf32>
    %cst_5 = arith.constant 0.000000e+00 : f32
    %6 = vector.broadcast %cst_5 : f32 to vector<32x128xf32>
    %7 = arith.maximumf %5, %6 : vector<32x128xf32>
    %8 = arith.truncf %7 : vector<32x128xf32> to vector<32x128xbf16>
    %c0_6 = arith.constant 0 : index
    %c0_7 = arith.constant 0 : index
    %9 = vector.load %arg4[%c0_6, %c0_7] : memref<32x128xbf16, #tpu.memory_space<vmem>>, vector<32x128xbf16>
    tpu.vector_store %arg4[%c0_6, %c0_7], %8 {strides = array<i32>} : memref<32x128xbf16, #tpu.memory_space<vmem>>, vector<32x128xbf16>,
    return
  }
  func.func @transform_0(%arg0: i32) -> (i32, i32) {
    %c0_i32 = arith.constant 0 : i32
    %c0_i32_0 = arith.constant 0 : i32
    %c0_i32_1 = arith.constant 0 : i32
    return %c0_i32, %c0_i32_0 : i32, i32
  }
  func.func @transform_1(%arg0: i32) -> (i32, i32) {
    %c0_i32 = arith.constant 0 : i32
    %c0_i32_0 = arith.constant 0 : i32
    %c0_i32_1 = arith.constant 0 : i32
    return %c0_i32, %c0_i32_0 : i32, i32
  }
  func.func @transform_2(%arg0: i32) -> (i32, i32) {
    %c0_i32 = arith.constant 0 : i32
    %c0_i32_0 = arith.constant 0 : i32
    return %c0_i32, %arg0 : i32, i32
  }
  func.func @transform_3(%arg0: i32) -> (i32, i32) {
    %c0_i32 = arith.constant 0 : i32
    %c0_i32_0 = arith.constant 0 : i32
    return %c0_i32, %arg0 : i32, i32
  }
}

module attributes {stable_mosaic.version = 11 : i64} {
  func.func @_conv_matmul_kernel(%arg0: i32, %arg1: memref<8x36xbf16, #tpu.memory_space<vmem>>, %arg2: memref<8x1xf32, #tpu.memory_space<vmem>>, %arg3: memref<36x128xbf16, #tpu.memory_space<vmem>>, %arg4: memref<8x128xf32, #tpu.memory_space<vmem>>) attributes {dimension_semantics = [#tpu.dimension_semantics<parallel>], iteration_bounds = array<i64: 1>, scalar_prefetch = 0 : i64, scratch_operands = 0 : i64, tpu.core_type = #tpu.core_type<tc>, window_params = [{pipeline_mode = #tpu.pipeline_mode<synchronous>, transform_indices = @transform_0, window_bounds = array<i64: 8, 36>}, {pipeline_mode = #tpu.pipeline_mode<synchronous>, transform_indices = @transform_1, window_bounds = array<i64: 8, 1>}, {transform_indices = @transform_2, window_bounds = array<i64: 36, 128>}, {transform_indices = @transform_3, window_bounds = array<i64: 8, 128>}]} {
    %c0 = arith.constant 0 : index
    %c0_0 = arith.constant 0 : index
    %0 = vector.load %arg1[%c0, %c0_0] : memref<8x36xbf16, #tpu.memory_space<vmem>>, vector<8x36xbf16>
    %c0_1 = arith.constant 0 : index
    %c0_2 = arith.constant 0 : index
    %1 = vector.load %arg3[%c0_1, %c0_2] : memref<36x128xbf16, #tpu.memory_space<vmem>>, vector<36x128xbf16>
    %cst = arith.constant dense<0.000000e+00> : vector<8x128xf32>
    %2 = tpu.matmul %0, %1, %cst {dimension_numbers = #tpu.dot_dimension_numbers<[1], [0], [0], [1], [0, 0, 1, 1], [], []>} : vector<8x36xbf16>, vector<36x128xbf16>, vector<8x128xf32> -> vector<8x128xf32>
    %c0_3 = arith.constant 0 : index
    %c0_4 = arith.constant 0 : index
    %3 = vector.load %arg2[%c0_3, %c0_4] : memref<8x1xf32, #tpu.memory_space<vmem>>, vector<8x1xf32>
    %4 = vector.broadcast %3 : vector<8x1xf32> to vector<8x128xf32>
    %5 = arith.addf %2, %4 : vector<8x128xf32>
    %c0_5 = arith.constant 0 : index
    %c0_6 = arith.constant 0 : index
    %6 = vector.load %arg4[%c0_5, %c0_6] : memref<8x128xf32, #tpu.memory_space<vmem>>, vector<8x128xf32>
    tpu.vector_store %arg4[%c0_5, %c0_6], %5 {strides = array<i32>} : memref<8x128xf32, #tpu.memory_space<vmem>>, vector<8x128xf32>,
    return
  }
  func.func @transform_0(%arg0: i32) -> (i32, i32) {
    %c0_i32 = arith.constant 0 : i32
    %c0_i32_0 = arith.constant 0 : i32
    %c0_i32_1 = arith.constant 0 : i32
    return %c0_i32, %c0_i32_0 : i32, i32
  }
  func.func @transform_1(%arg0: i32) -> (i32, i32) {
    %c0_i32 = arith.constant 0 : i32
    %c0_i32_0 = arith.constant 0 : i32
    %c0_i32_1 = arith.constant 0 : i32
    return %c0_i32, %c0_i32_0 : i32, i32
  }
  func.func @transform_2(%arg0: i32) -> (i32, i32) {
    %c0_i32 = arith.constant 0 : i32
    %c0_i32_0 = arith.constant 0 : i32
    return %c0_i32, %arg0 : i32, i32
  }
  func.func @transform_3(%arg0: i32) -> (i32, i32) {
    %c0_i32 = arith.constant 0 : i32
    %c0_i32_0 = arith.constant 0 : i32
    return %c0_i32, %arg0 : i32, i32
  }
}

</mosaic_0001>

<llo_original>
// kernel: tpu_custom_call.1
$region0: #{tpu_custom_call.1}
  #allocation0 [shape = 'u32[]', space=smem, size = 0x4, offset = 0x4, fixed_abs, tag = 'smem constant byte address 0x4 - core index']
  #allocation1 [shape = 'u32[144,128]{1,0:T(1,128)}', space=vmem, size = 0x12000, scoped, tag = 'internal scratch']
  %s0 = inlined_call_operand.hbm [shape: f32[8,128], index: 0, kind: input, shape index: {}]
  %s1 = inlined_call_operand.hbm [shape: f32[8,128], index: 1, kind: output, shape index: {}]
  %s2 = sld [smem:[#allocation0]]
  $region18: #{tpu_custom_call.1} parent=0
    _
  %s4 = ssub.s32 1, %s2
  %s5 = scalar_select 0, %s4, %s2
  $region1: #{tpu_custom_call.1} parent=0
    #allocation2 [shape = 'u8[4096]{0}', space=vmem, size = 0x1000, scoped, tag = 'input window, operand 0, single buffered']
    #allocation3 [shape = 's32[1]{0}', space=sflag, size = 0x4, scoped, tag = 'scoped memory for tpu_custom_call.1']
    #allocation4 [shape = 's32[1]{0}', space=sflag, size = 0x4, scoped, tag = 'scoped memory for tpu_custom_call.1']
    #allocation5 [shape = 'u8[4096]{0}', space=vmem, size = 0x1000, scoped, tag = 'output window, operand 0, single buffered']
    %6 = vsyncpa [#allocation3], 0
    %7 = vsyncpa [#allocation4], 0
    // Predicated region
    $region2: #{tpu_custom_call.1} parent=1 // pred_check
      _
    $region3: #{tpu_custom_call.1} parent=1 // pred_check_branch
      %9 = sbr.rel (0) target = $region5
    $region4: #{tpu_custom_call.1} parent=1 // pred_region
      %s11 = ssub.s32 128, 128
      %12 = vsyncadd [#allocation3], %s11
      %s14 = sshll.u32 [#allocation2], 4
      %s15 = int_to_ptr.vmem [resolvable:$true] %s14
      %17 = dma.hbm_to_vmem [thread:$0]  %s0, 128, %s15, [#allocation3]
    $region5: #{tpu_custom_call.1} parent=1 // pred_fallthru
      _
    // Predicated region
    $region6: #{tpu_custom_call.1} parent=1 // pred_check
      _
    $region7: #{tpu_custom_call.1} parent=1 // pred_check_branch
      %19 = sbr.rel (0) target = $region9
    $region8: #{tpu_custom_call.1} parent=1 // pred_region
      %20 = dma.done [#allocation3], 128
    $region9: #{tpu_custom_call.1} parent=1 // pred_fallthru
      _
    %v21 = vld [vmem:[#allocation2] sm:$0xff]
    %v22 = vand.u32 2147483647, %v21
    %v23 = vand.u32 2147483647, %v21
    %v24 = vmin.f32 %v22, %v23
    %v25 = vmax.f32 %v22, %v23
    %v26 = vrcp.pop %v25
    %v27 = vmul.f32 %v24, %v26
    %v28 = vmul.f32 %v27, %v27
    %v29 = vmul.f32 0.002785687, %v28
    %v30 = vadd.f32 %v29, -0.015866
    %v31 = vmul.f32 %v30, %v28
    %v32 = vadd.f32 %v31, 0.04247222
    %v33 = vmul.f32 %v32, %v28
    %v34 = vadd.f32 %v33, -0.074975304
    %v35 = vmul.f32 %v34, %v28
    %v36 = vadd.f32 %v35, 0.1064488
    %v37 = vmul.f32 %v36, %v28
    %v38 = vadd.f32 %v37, -0.14207031
    %v39 = vmul.f32 %v38, %v28
    %v40 = vadd.f32 %v39, 0.19993454
    %v41 = vmul.f32 %v40, %v28
    %v42 = vadd.f32 %v41, -0.33333147
    %v43 = vmul.f32 %v42, %v28
    %v44 = vmul.f32 %v43, %v27
    %v45 = vadd.f32 %v44, %v27
    %vm46 = vcmp.gt.f32.partialorder %v23, %v22
    %v47 = vsub.f32 1.5707964, %v45
    %v48 = vsel %vm46, %v47, %v45
    %vm49 = vcmp.lt.f32.partialorder %v21, 0.0
    %v50 = vsub.f32 3.1415927, %v48
    %v51 = vsel %vm49, %v50, %v48
    %vm52 = vcmp.lt.s32.totalorder %v21, 0
    %v53 = vsel %vm52, 3.1415927, 0.0
    %vm54 = vcmp.eq.f32.partialorder %v21, 0.0
    %v55 = vsel %vm54, %v53, %v51
    %vm56 = vcmp.ne.f32.partialorder %v21, %v21
    %vm57 = vcmp.ne.f32.partialorder %v21, %v21
    %vm58 = vmor %vm56, %vm57
    %v59 = vsel %vm58, nan, %v55
    %vm60 = vcmp.lt.f32.partialorder %v21, 0.0
    %v61 = vsel %vm60, 2.3561945, 0.7853982
    %vm62 = vcmp.eq.s32.totalorder %v22, inf
    %vm63 = vcmp.eq.s32.totalorder %v23, inf
    %vm64 = vmand %vm62, %vm63
    %v65 = vsel %vm64, %v61, %v59
    %v66 = vand.u32 2147483647, %v65
    %v67 = vand.u32 %v21, 2147483648
    %v68 = vor.u32 %v66, %v67
    %69 = vst [vmem:[#allocation5] sm:$0xff] %v68
    // Predicated region
    $region10: #{tpu_custom_call.1} parent=1 // pred_check
      _
    $region11: #{tpu_custom_call.1} parent=1 // pred_check_branch
      %71 = sbr.rel (0) target = $region13
    $region12: #{tpu_custom_call.1} parent=1 // pred_region
      %s73 = ssub.s32 128, 128
      %74 = vsyncadd [#allocation4], %s73
      %s76 = sshll.u32 [#allocation5], 4
      %s77 = int_to_ptr.vmem [resolvable:$true] %s76
      %79 = dma.vmem_to_hbm [thread:$0]  %s77, 128, %s1, [#allocation4]
    $region13: #{tpu_custom_call.1} parent=1 // pred_fallthru
      _
    // Predicated region
    $region14: #{tpu_custom_call.1} parent=1 // pred_check
      _
    $region15: #{tpu_custom_call.1} parent=1 // pred_check_branch
      %81 = sbr.rel (0) target = $region17
    $region16: #{tpu_custom_call.1} parent=1 // pred_region
      %82 = dma.done [#allocation4], 128
    $region17: #{tpu_custom_call.1} parent=1 // pred_fallthru
      _
    %83 = vsyncpa [#allocation3], 1
    %84 = vsyncpa [#allocation4], 1

// kernel: custom-call.1
$region0: #{custom-call.1}
  %s0 = inlined_call_operand.hbm [shape: c64[2,1,16,16], index: 0, kind: input, shape index: {}]
  %s1 = inlined_call_operand.vmem [shape: f32[2,1,16,16], index: 1, kind: output, shape index: {}]
  %s2 = scalar_lea.hbm %s0, 512
  $region1: #{custom-call.1} parent=0
    #allocation0 [shape = 's32[1]{0}', space=sflag, size = 0x4, scoped, tag = 'scoped memory for custom-call.1']
    %3 = vsyncpa [#allocation0], 0
    %s4 = sshll.u32 %s1, 4
    %s5 = int_to_ptr.vmem [resolvable:$true] %s4
    %7 = dma.hbm_to_vmem [thread:$0]  %s2, 512, %s5, [#allocation0]
    %8 = dma.done [#allocation0], 512
    %9 = vsyncpa [#allocation0], 1

// kernel: custom-call
$region0: #{custom-call}
  %s0 = inlined_call_operand.hbm [shape: c64[2,1,16,16], index: 0, kind: input, shape index: {}]
  %s1 = inlined_call_operand.vmem [shape: f32[2,1,16,16], index: 1, kind: output, shape index: {}]
  $region1: #{custom-call} parent=0
    #allocation0 [shape = 's32[1]{0}', space=sflag, size = 0x4, scoped, tag = 'scoped memory for custom-call']
    %2 = vsyncpa [#allocation0], 0
    %s3 = sshll.u32 %s1, 4
    %s4 = int_to_ptr.vmem [resolvable:$true] %s3
    %6 = dma.hbm_to_vmem [thread:$0]  %s0, 512, %s4, [#allocation0]
    %7 = dma.done [#allocation0], 512
    %8 = vsyncpa [#allocation0], 1

// kernel: net6_forward.6
$region0: #{net6_forward.6}
  #allocation0 [shape = 'u32[]', space=smem, size = 0x4, offset = 0x4, fixed_abs, tag = 'smem constant byte address 0x4 - core index']
  #allocation1 [shape = 'u32[144,128]{1,0:T(1,128)}', space=vmem, size = 0x12000, scoped, tag = 'internal scratch']
  %s0 = inlined_call_operand.vmem [shape: bf16[4,18], index: 0, kind: input, shape index: {}]
  %s1 = inlined_call_operand.vmem [shape: f32[4,1], index: 1, kind: input, shape index: {}]
  %s2 = inlined_call_operand.vmem [shape: bf16[18,128], index: 2, kind: input, shape index: {}]
  %s3 = inlined_call_operand.vmem [shape: bf16[4,128], index: 3, kind: output, shape index: {}]
  %s4 = sld [smem:[#allocation0]]
  $region22: #{net6_forward.6} parent=0
    _
  %s6 = ssub.s32 1, %s4
  %s7 = scalar_select 0, %s6, %s4
  // Predicated region
  $region2: #{net6_forward.6} parent=0 // pred_check
    _
  $region3: #{net6_forward.6} parent=0 // pred_check_branch
    %9 = sbr.rel (0) target = $region5
  $region4: #{net6_forward.6} parent=0 // pred_region
    _
  $region5: #{net6_forward.6} parent=0 // pred_fallthru
    _
  // Predicated region
  $region6: #{net6_forward.6} parent=0 // pred_check
    _
  $region7: #{net6_forward.6} parent=0 // pred_check_branch
    %11 = sbr.rel (0) target = $region9
  $region8: #{net6_forward.6} parent=0 // pred_region
    _
  $region9: #{net6_forward.6} parent=0 // pred_fallthru
    _
  // Predicated region
  $region10: #{net6_forward.6} parent=0 // pred_check
    _
  $region11: #{net6_forward.6} parent=0 // pred_check_branch
    %13 = sbr.rel (0) target = $region13
  $region12: #{net6_forward.6} parent=0 // pred_region
    _
  $region13: #{net6_forward.6} parent=0 // pred_fallthru
    _
  %v15 = vld [vmem:[%s0] sm:$0x3]
  %v16 = vld [vmem:[%s2] sm:$0xf]
  %v17 = vld [vmem:[%s2 + $0x4] sm:$0xf]
  %v18 = vld [vmem:[%s2 + $0x8] sm:$0x1]
  %v19 = vld [vmem:[%s1] sm:$0xf]
  %21 = vset.pattern.permute.xlu0 0
  %22 = vperm.xlu0 %21, %v19
  %v23 = vpop.permute.xlu0 %22
  %v28 = vunpack.c.l.b16 %v16
  %v29 = vunpack.c.l.b16 %v17
  %v30 = vunpack.c.l.b16 %v18
  %v31 = vpack.c.b16 %v29, %v28
  %v32 = vpack.c.b16 %v30, %v30
  %vm34 = vcmask 146432
  %v36 = vsel %vm34, %v15, 0
  %vm38 = vcmask 1040384
  %v40 = vsel %vm38, %v32, 0
  %42 = vmatprep.subr.bf16.mxu0 0
  %43 = vmatpush1.bf16.msra.mxu0 %v31
  %44 = vmatprep.subr.bf16.mxu0 0
  %45 = vmatpush1.bf16.msra.mxu0 %v40
  %46 = vmatprep.subr.bf16.mxu0 0
  %47 = vmatpush1.bf16.msra.mxu0 0
  %48 = vmatprep.subr.bf16.mxu0 0
  %49 = vmatpush1.bf16.msra.mxu0 0
  %50 = vmatprep.subr.bf16.mxu0 0
  %51 = vmatpush1.bf16.msra.mxu0 0
  %52 = vmatprep.subr.bf16.mxu0 0
  %53 = vmatpush1.bf16.msra.mxu0 0
  %54 = vmatprep.subr.bf16.mxu0 0
  %55 = vmatpush1.bf16.msra.mxu0 0
  %56 = vmatprep.subr.bf16.mxu0 0
  %57 = vmatpush1.bf16.msra.mxu0 0
  %58 = vmatprep.subr.bf16.mxu0 0
  %59 = vmatpush1.bf16.msra.mxu0 0
  %60 = vmatprep.subr.bf16.mxu0 0
  %61 = vmatpush1.bf16.msra.mxu0 0
  %62 = vmatprep.subr.bf16.mxu0 0
  %63 = vmatpush1.bf16.msra.mxu0 0
  %64 = vmatprep.subr.bf16.mxu0 0
  %65 = vmatpush1.bf16.msra.mxu0 0
  %66 = vmatprep.subr.bf16.mxu0 0
  %67 = vmatpush1.bf16.msra.mxu0 0
  %68 = vmatprep.subr.bf16.mxu0 0
  %69 = vmatpush1.bf16.msra.mxu0 0
  %70 = vmatprep.subr.bf16.mxu0 0
  %71 = vmatpush1.bf16.msra.mxu0 0
  %72 = vmatprep.subr.bf16.mxu0 0
  %73 = vmatpush1.bf16.msra.mxu0 0
  %74 = vmatprep.mubr.bf16.mxu0 0
  %75 = vmatmul.mubr.bf16.gmra.mrb[0].mxu0 %v36
  %v76 = vpop.f32.mrb[0].mxu0
  %v77 = vadd.f32 %v23, %v76
  %v78 = vpop.f32.mrb[0].mxu0
  %v79 = vpop.f32.mrb[0].mxu0
  %v80 = vpop.f32.mrb[0].mxu0
  %81 = vdwg.mxu0
  %v82 = vmax.f32 %v77, 0.0
  %v83 = vpack.c.bf16 %v82, %v82
  %84 = vst [vmem:[%s3] sm:$0x3] %v83
  // Predicated region
  $region14: #{net6_forward.6} parent=0 // pred_check
    _
  $region15: #{net6_forward.6} parent=0 // pred_check_branch
    %86 = sbr.rel (0) target = $region17
  $region16: #{net6_forward.6} parent=0 // pred_region
    _
  $region17: #{net6_forward.6} parent=0 // pred_fallthru
    _
  // Predicated region
  $region18: #{net6_forward.6} parent=0 // pred_check
    _
  $region19: #{net6_forward.6} parent=0 // pred_check_branch
    %88 = sbr.rel (0) target = $region21
  $region20: #{net6_forward.6} parent=0 // pred_region
    _
  $region21: #{net6_forward.6} parent=0 // pred_fallthru
    _

// kernel: net6_forward.7
$region0: #{net6_forward.7}
  #allocation0 [shape = 'u32[]', space=smem, size = 0x4, offset = 0x4, fixed_abs, tag = 'smem constant byte address 0x4 - core index']
  #allocation1 [shape = 'u32[144,128]{1,0:T(1,128)}', space=vmem, size = 0x12000, scoped, tag = 'internal scratch']
  %s0 = inlined_call_operand.vmem [shape: bf16[8,36], index: 0, kind: input, shape index: {}]
  %s1 = inlined_call_operand.vmem [shape: f32[8,1], index: 1, kind: input, shape index: {}]
  %s2 = inlined_call_operand.vmem [shape: bf16[36,128], index: 2, kind: input, shape index: {}]
  %s3 = inlined_call_operand.vmem [shape: bf16[8,128], index: 3, kind: output, shape index: {}]
  %s4 = sld [smem:[#allocation0]]
  $region22: #{net6_forward.7} parent=0
    _
  %s6 = ssub.s32 1, %s4
  %s7 = scalar_select 0, %s6, %s4
  // Predicated region
  $region2: #{net6_forward.7} parent=0 // pred_check
    _
  $region3: #{net6_forward.7} parent=0 // pred_check_branch
    %9 = sbr.rel (0) target = $region5
  $region4: #{net6_forward.7} parent=0 // pred_region
    _
  $region5: #{net6_forward.7} parent=0 // pred_fallthru
    _
  // Predicated region
  $region6: #{net6_forward.7} parent=0 // pred_check
    _
  $region7: #{net6_forward.7} parent=0 // pred_check_branch
    %11 = sbr.rel (0) target = $region9
  $region8: #{net6_forward.7} parent=0 // pred_region
    _
  $region9: #{net6_forward.7} parent=0 // pred_fallthru
    _
  // Predicated region
  $region10: #{net6_forward.7} parent=0 // pred_check
    _
  $region11: #{net6_forward.7} parent=0 // pred_check_branch
    %13 = sbr.rel (0) target = $region13
  $region12: #{net6_forward.7} parent=0 // pred_region
    _
  $region13: #{net6_forward.7} parent=0 // pred_fallthru
    _
  %v15 = vld [vmem:[%s0] sm:$0xf]
  %v16 = vld [vmem:[%s2] sm:$0xf]
  %v17 = vld [vmem:[%s2 + $0x4] sm:$0xf]
  %v18 = vld [vmem:[%s2 + $0x8] sm:$0xf]
  %v19 = vld [vmem:[%s2 + $0xc] sm:$0xf]
  %v20 = vld [vmem:[%s2 + $0x10] sm:$0x3]
  %v21 = vld [vmem:[%s1] sm:$0xff]
  %23 = vset.pattern.permute.xlu0 0
  %24 = vperm.xlu0 %23, %v21
  %v25 = vpop.permute.xlu0 %24
  %v32 = vunpack.c.l.b16 %v16
  %v33 = vunpack.c.l.b16 %v17
  %v34 = vunpack.c.l.b16 %v18
  %v35 = vunpack.c.l.b16 %v19
  %v36 = vunpack.c.l.b16 %v20
  %v37 = vpack.c.b16 %v33, %v32
  %v38 = vpack.c.b16 %v35, %v34
  %v39 = vpack.c.b16 %v36, %v36
  %vm42 = vcmask 293888
  %v44 = vsel %vm42, %v15, 0
  %vm46 = vcmask 1041408
  %v48 = vsel %vm46, %v39, 0
  %50 = vmatprep.subr.bf16.mxu0 0
  %51 = vmatpush1.bf16.msra.mxu0 %v37
  %52 = vmatprep.subr.bf16.mxu0 0
  %53 = vmatpush1.bf16.msra.mxu0 %v38
  %54 = vmatprep.subr.bf16.mxu0 0
  %55 = vmatpush1.bf16.msra.mxu0 %v48
  %56 = vmatprep.subr.bf16.mxu0 0
  %57 = vmatpush1.bf16.msra.mxu0 0
  %58 = vmatprep.subr.bf16.mxu0 0
  %59 = vmatpush1.bf16.msra.mxu0 0
  %60 = vmatprep.subr.bf16.mxu0 0
  %61 = vmatpush1.bf16.msra.mxu0 0
  %62 = vmatprep.subr.bf16.mxu0 0
  %63 = vmatpush1.bf16.msra.mxu0 0
  %64 = vmatprep.subr.bf16.mxu0 0
  %65 = vmatpush1.bf16.msra.mxu0 0
  %66 = vmatprep.subr.bf16.mxu0 0
  %67 = vmatpush1.bf16.msra.mxu0 0
  %68 = vmatprep.subr.bf16.mxu0 0
  %69 = vmatpush1.bf16.msra.mxu0 0
  %70 = vmatprep.subr.bf16.mxu0 0
  %71 = vmatpush1.bf16.msra.mxu0 0
  %72 = vmatprep.subr.bf16.mxu0 0
  %73 = vmatpush1.bf16.msra.mxu0 0
  %74 = vmatprep.subr.bf16.mxu0 0
  %75 = vmatpush1.bf16.msra.mxu0 0
  %76 = vmatprep.subr.bf16.mxu0 0
  %77 = vmatpush1.bf16.msra.mxu0 0
  %78 = vmatprep.subr.bf16.mxu0 0
  %79 = vmatpush1.bf16.msra.mxu0 0
  %80 = vmatprep.subr.bf16.mxu0 0
  %81 = vmatpush1.bf16.msra.mxu0 0
  %82 = vmatprep.mubr.bf16.mxu0 0
  %83 = vmatmul.mubr.bf16.gmra.mrb[0].mxu0 %v44
  %v84 = vpop.f32.mrb[0].mxu0
  %v85 = vadd.f32 %v25, %v84
  %v86 = vpop.f32.mrb[0].mxu0
  %v87 = vpop.f32.mrb[0].mxu0
  %v88 = vpop.f32.mrb[0].mxu0
  %89 = vdwg.mxu0
  %v90 = vmax.f32 %v85, 0.0
  %v91 = vpack.c.bf16 %v90, %v90
  %92 = vst [vmem:[%s3] sm:$0xf] %v91
  // Predicated region
  $region14: #{net6_forward.7} parent=0 // pred_check
    _
  $region15: #{net6_forward.7} parent=0 // pred_check_branch
    %94 = sbr.rel (0) target = $region17
  $region16: #{net6_forward.7} parent=0 // pred_region
    _
  $region17: #{net6_forward.7} parent=0 // pred_fallthru
    _
  // Predicated region
  $region18: #{net6_forward.7} parent=0 // pred_check
    _
  $region19: #{net6_forward.7} parent=0 // pred_check_branch
    %96 = sbr.rel (0) target = $region21
  $region20: #{net6_forward.7} parent=0 // pred_region
    _
  $region21: #{net6_forward.7} parent=0 // pred_fallthru
    _

// kernel: net6_forward.8
$region0: #{net6_forward.8}
  #allocation0 [shape = 'u32[]', space=smem, size = 0x4, offset = 0x4, fixed_abs, tag = 'smem constant byte address 0x4 - core index']
  #allocation1 [shape = 'u32[144,128]{1,0:T(1,128)}', space=vmem, size = 0x12000, scoped, tag = 'internal scratch']
  %s0 = inlined_call_operand.vmem [shape: bf16[16,72], index: 0, kind: input, shape index: {}]
  %s1 = inlined_call_operand.vmem [shape: f32[16,1], index: 1, kind: input, shape index: {}]
  %s2 = inlined_call_operand.vmem [shape: bf16[72,128], index: 2, kind: input, shape index: {}]
  %s3 = inlined_call_operand.vmem [shape: bf16[16,128], index: 3, kind: output, shape index: {}]
  %s4 = sld [smem:[#allocation0]]
  $region22: #{net6_forward.8} parent=0
    _
  %s6 = ssub.s32 1, %s4
  %s7 = scalar_select 0, %s6, %s4
  // Predicated region
  $region2: #{net6_forward.8} parent=0 // pred_check
    _
  $region3: #{net6_forward.8} parent=0 // pred_check_branch
    %9 = sbr.rel (0) target = $region5
  $region4: #{net6_forward.8} parent=0 // pred_region
    _
  $region5: #{net6_forward.8} parent=0 // pred_fallthru
    _
  // Predicated region
  $region6: #{net6_forward.8} parent=0 // pred_check
    _
  $region7: #{net6_forward.8} parent=0 // pred_check_branch
    %11 = sbr.rel (0) target = $region9
  $region8: #{net6_forward.8} parent=0 // pred_region
    _
  $region9: #{net6_forward.8} parent=0 // pred_fallthru
    _
  // Predicated region
  $region10: #{net6_forward.8} parent=0 // pred_check
    _
  $region11: #{net6_forward.8} parent=0 // pred_check_branch
    %13 = sbr.rel (0) target = $region13
  $region12: #{net6_forward.8} parent=0 // pred_region
    _
  $region13: #{net6_forward.8} parent=0 // pred_fallthru
    _
  %v15 = vld [vmem:[%s0] sm:$0xf]
  %v16 = vld [vmem:[%s0 + $0x4] sm:$0xf]
  %v17 = vld [vmem:[%s2] sm:$0xf]
  %v18 = vld [vmem:[%s2 + $0x4] sm:$0xf]
  %v19 = vld [vmem:[%s2 + $0x8] sm:$0xf]
  %v20 = vld [vmem:[%s2 + $0xc] sm:$0xf]
  %v21 = vld [vmem:[%s2 + $0x10] sm:$0xf]
  %v22 = vld [vmem:[%s2 + $0x14] sm:$0xf]
  %v23 = vld [vmem:[%s2 + $0x18] sm:$0xf]
  %v24 = vld [vmem:[%s2 + $0x1c] sm:$0xf]
  %v25 = vld [vmem:[%s2 + $0x20] sm:$0xf]
  %v26 = vld [vmem:[%s1] sm:$0xff]
  %v27 = vld [vmem:[%s1 + $0x8] sm:$0xff]
  %29 = vset.pattern.permute.xlu0 0
  %30 = vperm.xlu0 %29, %v26
  %v31 = vpop.permute.xlu0 %30
  %34 = vset.pattern.permute.xlu0 0
  %35 = vperm.xlu0 %34, %v27
  %v36 = vpop.permute.xlu0 %35
  %v40 = vunpack.c.l.b16 %v15
  %v41 = vunpack.c.l.b16 %v16
  %v42 = vpack.c.b16 %v41, %v40
  %v52 = vunpack.c.l.b16 %v17
  %v53 = vunpack.c.l.b16 %v18
  %v54 = vunpack.c.l.b16 %v19
  %v55 = vunpack.c.l.b16 %v20
  %v56 = vunpack.c.l.b16 %v21
  %v57 = vunpack.c.l.b16 %v22
  %v58 = vunpack.c.l.b16 %v23
  %v59 = vunpack.c.l.b16 %v24
  %v60 = vunpack.c.l.b16 %v25
  %v61 = vpack.c.b16 %v53, %v52
  %v62 = vpack.c.b16 %v55, %v54
  %v63 = vpack.c.b16 %v57, %v56
  %v64 = vpack.c.b16 %v59, %v58
  %v65 = vpack.c.b16 %v60, %v60
  %vm70 = vcmask 588800
  %v72 = vsel %vm70, %v42, 0
  %vm74 = vcmask 1043456
  %v76 = vsel %vm74, %v65, 0
  %78 = vmatprep.subr.bf16.mxu0 0
  %79 = vmatpush1.bf16.msra.mxu0 %v61
  %80 = vmatprep.subr.bf16.mxu0 0
  %81 = vmatpush1.bf16.msra.mxu0 %v62
  %82 = vmatprep.subr.bf16.mxu0 0
  %83 = vmatpush1.bf16.msra.mxu0 %v63
  %84 = vmatprep.subr.bf16.mxu0 0
  %85 = vmatpush1.bf16.msra.mxu0 %v64
  %86 = vmatprep.subr.bf16.mxu0 0
  %87 = vmatpush1.bf16.msra.mxu0 %v76
  %88 = vmatprep.subr.bf16.mxu0 0
  %89 = vmatpush1.bf16.msra.mxu0 0
  %90 = vmatprep.subr.bf16.mxu0 0
  %91 = vmatpush1.bf16.msra.mxu0 0
  %92 = vmatprep.subr.bf16.mxu0 0
  %93 = vmatpush1.bf16.msra.mxu0 0
  %94 = vmatprep.subr.bf16.mxu0 0
  %95 = vmatpush1.bf16.msra.mxu0 0
  %96 = vmatprep.subr.bf16.mxu0 0
  %97 = vmatpush1.bf16.msra.mxu0 0
  %98 = vmatprep.subr.bf16.mxu0 0
  %99 = vmatpush1.bf16.msra.mxu0 0
  %100 = vmatprep.subr.bf16.mxu0 0
  %101 = vmatpush1.bf16.msra.mxu0 0
  %102 = vmatprep.subr.bf16.mxu0 0
  %103 = vmatpush1.bf16.msra.mxu0 0
  %104 = vmatprep.subr.bf16.mxu0 0
  %105 = vmatpush1.bf16.msra.mxu0 0
  %106 = vmatprep.subr.bf16.mxu0 0
  %107 = vmatpush1.bf16.msra.mxu0 0
  %108 = vmatprep.subr.bf16.mxu0 0
  %109 = vmatpush1.bf16.msra.mxu0 0
  %110 = vmatprep.mubr.bf16.mxu0 0
  %111 = vmatmul.mubr.bf16.gmra.mrb[0].mxu0 %v72
  %v112 = vpop.f32.mrb[0].mxu0
  %v113 = vadd.f32 %v31, %v112
  %v114 = vpop.f32.mrb[0].mxu0
  %v115 = vpop.f32.mrb[0].mxu0
  %v116 = vadd.f32 %v36, %v115
  %v117 = vpop.f32.mrb[0].mxu0
  %118 = vdwg.mxu0
  %v119 = vmax.f32 %v113, 0.0
  %v120 = vmax.f32 %v116, 0.0
  %v121 = vpack.c.bf16 %v120, %v119
  %v123 = vunpack.c.l.b16 %v121
  %v124 = vunpack.c.h.b16 %v121
  %v125 = vpack.c.b16 %v123, %v123
  %v126 = vpack.c.b16 %v124, %v124
  %129 = vst [vmem:[%s3] sm:$0xf] %v125
  %130 = vst [vmem:[%s3 + $0x4] sm:$0xf] %v126
  // Predicated region
  $region14: #{net6_forward.8} parent=0 // pred_check
    _
  $region15: #{net6_forward.8} parent=0 // pred_check_branch
    %132 = sbr.rel (0) target = $region17
  $region16: #{net6_forward.8} parent=0 // pred_region
    _
  $region17: #{net6_forward.8} parent=0 // pred_fallthru
    _
  // Predicated region
  $region18: #{net6_forward.8} parent=0 // pred_check
    _
  $region19: #{net6_forward.8} parent=0 // pred_check_branch
    %134 = sbr.rel (0) target = $region21
  $region20: #{net6_forward.8} parent=0 // pred_region
    _
  $region21: #{net6_forward.8} parent=0 // pred_fallthru
    _

// kernel: net6_forward.9
$region0: #{net6_forward.9}
  #allocation0 [shape = 'u32[]', space=smem, size = 0x4, offset = 0x4, fixed_abs, tag = 'smem constant byte address 0x4 - core index']
  #allocation1 [shape = 'u32[144,128]{1,0:T(1,128)}', space=vmem, size = 0x12000, scoped, tag = 'internal scratch']
  %s0 = inlined_call_operand.vmem [shape: bf16[32,144], index: 0, kind: input, shape index: {}]
  %s1 = inlined_call_operand.vmem [shape: f32[32,1], index: 1, kind: input, shape index: {}]
  %s2 = inlined_call_operand.vmem [shape: bf16[144,128], index: 2, kind: input, shape index: {}]
  %s3 = inlined_call_operand.vmem [shape: bf16[32,128], index: 3, kind: output, shape index: {}]
  %s4 = sld [smem:[#allocation0]]
  $region22: #{net6_forward.9} parent=0
    _
  %s6 = ssub.s32 1, %s4
  %s7 = scalar_select 0, %s6, %s4
  // Predicated region
  $region2: #{net6_forward.9} parent=0 // pred_check
    _
  $region3: #{net6_forward.9} parent=0 // pred_check_branch
    %9 = sbr.rel (0) target = $region5
  $region4: #{net6_forward.9} parent=0 // pred_region
    _
  $region5: #{net6_forward.9} parent=0 // pred_fallthru
    _
  // Predicated region
  $region6: #{net6_forward.9} parent=0 // pred_check
    _
  $region7: #{net6_forward.9} parent=0 // pred_check_branch
    %11 = sbr.rel (0) target = $region9
  $region8: #{net6_forward.9} parent=0 // pred_region
    _
  $region9: #{net6_forward.9} parent=0 // pred_fallthru
    _
  // Predicated region
  $region10: #{net6_forward.9} parent=0 // pred_check
    _
  $region11: #{net6_forward.9} parent=0 // pred_check_branch
    %13 = sbr.rel (0) target = $region13
  $region12: #{net6_forward.9} parent=0 // pred_region
    _
  $region13: #{net6_forward.9} parent=0 // pred_fallthru
    _
  %v15 = vld [vmem:[%s0] sm:$0xff]
  %v16 = vld [vmem:[%s0 + $0x8] sm:$0xff]
  %v17 = vld [vmem:[%s0 + $0x10] sm:$0xff]
  %v18 = vld [vmem:[%s0 + $0x18] sm:$0xff]
  %v19 = vld [vmem:[%s2] sm:$0xf]
  %v20 = vld [vmem:[%s2 + $0x4] sm:$0xf]
  %v21 = vld [vmem:[%s2 + $0x8] sm:$0xf]
  %v22 = vld [vmem:[%s2 + $0xc] sm:$0xf]
  %v23 = vld [vmem:[%s2 + $0x10] sm:$0xf]
  %v24 = vld [vmem:[%s2 + $0x14] sm:$0xf]
  %v25 = vld [vmem:[%s2 + $0x18] sm:$0xf]
  %v26 = vld [vmem:[%s2 + $0x1c] sm:$0xf]
  %v27 = vld [vmem:[%s2 + $0x20] sm:$0xf]
  %v28 = vld [vmem:[%s2 + $0x24] sm:$0xf]
  %v29 = vld [vmem:[%s2 + $0x28] sm:$0xf]
  %v30 = vld [vmem:[%s2 + $0x2c] sm:$0xf]
  %v31 = vld [vmem:[%s2 + $0x30] sm:$0xf]
  %v32 = vld [vmem:[%s2 + $0x34] sm:$0xf]
  %v33 = vld [vmem:[%s2 + $0x38] sm:$0xf]
  %v34 = vld [vmem:[%s2 + $0x3c] sm:$0xf]
  %v35 = vld [vmem:[%s2 + $0x40] sm:$0xf]
  %v36 = vld [vmem:[%s2 + $0x44] sm:$0xf]
  %v37 = vld [vmem:[%s1] sm:$0xff]
  %v38 = vld [vmem:[%s1 + $0x8] sm:$0xff]
  %v39 = vld [vmem:[%s1 + $0x10] sm:$0xff]
  %v40 = vld [vmem:[%s1 + $0x18] sm:$0xff]
  %42 = vset.pattern.permute.xlu0 0
  %43 = vperm.xlu0 %42, %v37
  %v44 = vpop.permute.xlu0 %43
  %47 = vset.pattern.permute.xlu0 0
  %48 = vperm.xlu0 %47, %v38
  %v49 = vpop.permute.xlu0 %48
  %52 = vset.pattern.permute.xlu0 0
  %53 = vperm.xlu0 %52, %v39
  %v54 = vpop.permute.xlu0 %53
  %57 = vset.pattern.permute.xlu0 0
  %58 = vperm.xlu0 %57, %v40
  %v59 = vpop.permute.xlu0 %58
  %v65 = vunpack.c.l.b16 %v15
  %v66 = vunpack.c.h.b16 %v15
  %v67 = vunpack.c.l.b16 %v16
  %v68 = vunpack.c.h.b16 %v16
  %v69 = vunpack.c.l.b16 %v17
  %v70 = vunpack.c.h.b16 %v17
  %v71 = vunpack.c.l.b16 %v18
  %v72 = vunpack.c.h.b16 %v18
  %v73 = vpack.c.b16 %v67, %v65
  %v74 = vpack.c.b16 %v68, %v66
  %v75 = vpack.c.b16 %v71, %v69
  %v76 = vpack.c.b16 %v72, %v70
  %v97 = vunpack.c.l.b16 %v19
  %v98 = vunpack.c.l.b16 %v20
  %v99 = vunpack.c.l.b16 %v21
  %v100 = vunpack.c.l.b16 %v22
  %v101 = vunpack.c.l.b16 %v23
  %v102 = vunpack.c.l.b16 %v24
  %v103 = vunpack.c.l.b16 %v25
  %v104 = vunpack.c.l.b16 %v26
  %v105 = vunpack.c.l.b16 %v27
  %v106 = vunpack.c.l.b16 %v28
  %v107 = vunpack.c.l.b16 %v29
  %v108 = vunpack.c.l.b16 %v30
  %v109 = vunpack.c.l.b16 %v31
  %v110 = vunpack.c.l.b16 %v32
  %v111 = vunpack.c.l.b16 %v33
  %v112 = vunpack.c.l.b16 %v34
  %v113 = vunpack.c.l.b16 %v35
  %v114 = vunpack.c.l.b16 %v36
  %v115 = vpack.c.b16 %v98, %v97
  %v116 = vpack.c.b16 %v100, %v99
  %v117 = vpack.c.b16 %v102, %v101
  %v118 = vpack.c.b16 %v104, %v103
  %v119 = vpack.c.b16 %v106, %v105
  %v120 = vpack.c.b16 %v108, %v107
  %v121 = vpack.c.b16 %v110, %v109
  %v122 = vpack.c.b16 %v112, %v111
  %v123 = vpack.c.b16 %v114, %v113
  %vm133 = vcmask 130048
  %v135 = vsel %vm133, %v74, 0
  %v138 = vsel %vm133, %v76, 0
  %140 = vmatprep.subr.bf16.mxu0 0
  %141 = vmatpush1.bf16.msra.mxu0 %v115
  %142 = vmatprep.subr.bf16.mxu0 0
  %143 = vmatpush1.bf16.msra.mxu0 %v116
  %144 = vmatprep.subr.bf16.mxu0 0
  %145 = vmatpush1.bf16.msra.mxu0 %v117
  %146 = vmatprep.subr.bf16.mxu0 0
  %147 = vmatpush1.bf16.msra.mxu0 %v118
  %148 = vmatprep.subr.bf16.mxu0 0
  %149 = vmatpush1.bf16.msra.mxu0 %v119
  %150 = vmatprep.subr.bf16.mxu0 0
  %151 = vmatpush1.bf16.msra.mxu0 %v120
  %152 = vmatprep.subr.bf16.mxu0 0
  %153 = vmatpush1.bf16.msra.mxu0 %v121
  %154 = vmatprep.subr.bf16.mxu0 0
  %155 = vmatpush1.bf16.msra.mxu0 %v122
  %156 = vmatprep.subr.bf16.mxu0 0
  %157 = vmatpush1.bf16.msra.mxu0 %v123
  %158 = vmatprep.subr.bf16.mxu0 0
  %159 = vmatpush1.bf16.msra.mxu0 0
  %160 = vmatprep.subr.bf16.mxu0 0
  %161 = vmatpush1.bf16.msra.mxu0 0
  %162 = vmatprep.subr.bf16.mxu0 0
  %163 = vmatpush1.bf16.msra.mxu0 0
  %164 = vmatprep.subr.bf16.mxu0 0
  %165 = vmatpush1.bf16.msra.mxu0 0
  %166 = vmatprep.subr.bf16.mxu0 0
  %167 = vmatpush1.bf16.msra.mxu0 0
  %168 = vmatprep.subr.bf16.mxu0 0
  %169 = vmatpush1.bf16.msra.mxu0 0
  %170 = vmatprep.subr.bf16.mxu0 0
  %171 = vmatpush1.bf16.msra.mxu0 0
  %172 = vmatprep.mubr.bf16.mxu0 %v135
  %173 = vmatmul.mubr.bf16.gmra.mrb[0].mxu0 %v73
  %v174 = vpop.f32.mrb[0].mxu0
  %v175 = vadd.f32 %v44, %v174
  %v176 = vpop.f32.mrb[0].mxu0
  %v177 = vpop.f32.mrb[0].mxu0
  %v178 = vadd.f32 %v49, %v177
  %v179 = vpop.f32.mrb[0].mxu0
  %180 = vmatprep.mubr.bf16.mxu0 %v138
  %181 = vmatmul.mubr.bf16.gmra.mrb[0].mxu0 %v75
  %v182 = vpop.f32.mrb[0].mxu0
  %v183 = vadd.f32 %v54, %v182
  %v184 = vpop.f32.mrb[0].mxu0
  %v185 = vpop.f32.mrb[0].mxu0
  %v186 = vadd.f32 %v59, %v185
  %v187 = vpop.f32.mrb[0].mxu0
  %188 = vdwg.mxu0
  %v189 = vmax.f32 %v175, 0.0
  %v190 = vmax.f32 %v178, 0.0
  %v191 = vmax.f32 %v183, 0.0
  %v192 = vmax.f32 %v186, 0.0
  %v193 = vpack.c.bf16 %v190, %v189
  %v194 = vpack.c.bf16 %v192, %v191
  %v197 = vunpack.c.l.b16 %v193
  %v198 = vunpack.c.h.b16 %v193
  %v199 = vunpack.c.l.b16 %v194
  %v200 = vunpack.c.h.b16 %v194
  %v201 = vpack.c.b16 %v197, %v197
  %v202 = vpack.c.b16 %v198, %v198
  %v203 = vpack.c.b16 %v199, %v199
  %v204 = vpack.c.b16 %v200, %v200
  %209 = vst [vmem:[%s3] sm:$0xf] %v201
  %210 = vst [vmem:[%s3 + $0x4] sm:$0xf] %v202
  %211 = vst [vmem:[%s3 + $0x8] sm:$0xf] %v203
  %212 = vst [vmem:[%s3 + $0xc] sm:$0xf] %v204
  // Predicated region
  $region14: #{net6_forward.9} parent=0 // pred_check
    _
  $region15: #{net6_forward.9} parent=0 // pred_check_branch
    %214 = sbr.rel (0) target = $region17
  $region16: #{net6_forward.9} parent=0 // pred_region
    _
  $region17: #{net6_forward.9} parent=0 // pred_fallthru
    _
  // Predicated region
  $region18: #{net6_forward.9} parent=0 // pred_check
    _
  $region19: #{net6_forward.9} parent=0 // pred_check_branch
    %216 = sbr.rel (0) target = $region21
  $region20: #{net6_forward.9} parent=0 // pred_region
    _
  $region21: #{net6_forward.9} parent=0 // pred_fallthru
    _

// kernel: net6_forward.11
$region0: #{net6_forward.11}
  #allocation0 [shape = 'u32[]', space=smem, size = 0x4, offset = 0x4, fixed_abs, tag = 'smem constant byte address 0x4 - core index']
  #allocation1 [shape = 'u32[144,128]{1,0:T(1,128)}', space=vmem, size = 0x12000, scoped, tag = 'internal scratch']
  %s0 = inlined_call_operand.vmem [shape: bf16[8,36], index: 0, kind: input, shape index: {}]
  %s1 = inlined_call_operand.vmem [shape: f32[8,1], index: 1, kind: input, shape index: {}]
  %s2 = inlined_call_operand.vmem [shape: bf16[36,128], index: 2, kind: input, shape index: {}]
  %s3 = inlined_call_operand.vmem [shape: f32[8,128], index: 3, kind: output, shape index: {}]
  %s4 = sld [smem:[#allocation0]]
  $region22: #{net6_forward.11} parent=0
    _
  %s6 = ssub.s32 1, %s4
  %s7 = scalar_select 0, %s6, %s4
  // Predicated region
  $region2: #{net6_forward.11} parent=0 // pred_check
    _
  $region3: #{net6_forward.11} parent=0 // pred_check_branch
    %9 = sbr.rel (0) target = $region5
  $region4: #{net6_forward.11} parent=0 // pred_region
    _
  $region5: #{net6_forward.11} parent=0 // pred_fallthru
    _
  // Predicated region
  $region6: #{net6_forward.11} parent=0 // pred_check
    _
  $region7: #{net6_forward.11} parent=0 // pred_check_branch
    %11 = sbr.rel (0) target = $region9
  $region8: #{net6_forward.11} parent=0 // pred_region
    _
  $region9: #{net6_forward.11} parent=0 // pred_fallthru
    _
  // Predicated region
  $region10: #{net6_forward.11} parent=0 // pred_check
    _
  $region11: #{net6_forward.11} parent=0 // pred_check_branch
    %13 = sbr.rel (0) target = $region13
  $region12: #{net6_forward.11} parent=0 // pred_region
    _
  $region13: #{net6_forward.11} parent=0 // pred_fallthru
    _
  %v15 = vld [vmem:[%s0] sm:$0xf]
  %v16 = vld [vmem:[%s2] sm:$0xf]
  %v17 = vld [vmem:[%s2 + $0x4] sm:$0xf]
  %v18 = vld [vmem:[%s2 + $0x8] sm:$0xf]
  %v19 = vld [vmem:[%s2 + $0xc] sm:$0xf]
  %v20 = vld [vmem:[%s2 + $0x10] sm:$0x3]
  %v21 = vld [vmem:[%s1] sm:$0xff]
  %23 = vset.pattern.permute.xlu0 0
  %24 = vperm.xlu0 %23, %v21
  %v25 = vpop.permute.xlu0 %24
  %v32 = vunpack.c.l.b16 %v16
  %v33 = vunpack.c.l.b16 %v17
  %v34 = vunpack.c.l.b16 %v18
  %v35 = vunpack.c.l.b16 %v19
  %v36 = vunpack.c.l.b16 %v20
  %v37 = vpack.c.b16 %v33, %v32
  %v38 = vpack.c.b16 %v35, %v34
  %v39 = vpack.c.b16 %v36, %v36
  %vm42 = vcmask 293888
  %v44 = vsel %vm42, %v15, 0
  %vm46 = vcmask 1041408
  %v48 = vsel %vm46, %v39, 0
  %50 = vmatprep.subr.bf16.mxu0 0
  %51 = vmatpush1.bf16.msra.mxu0 %v37
  %52 = vmatprep.subr.bf16.mxu0 0
  %53 = vmatpush1.bf16.msra.mxu0 %v38
  %54 = vmatprep.subr.bf16.mxu0 0
  %55 = vmatpush1.bf16.msra.mxu0 %v48
  %56 = vmatprep.subr.bf16.mxu0 0
  %57 = vmatpush1.bf16.msra.mxu0 0
  %58 = vmatprep.subr.bf16.mxu0 0
  %59 = vmatpush1.bf16.msra.mxu0 0
  %60 = vmatprep.subr.bf16.mxu0 0
  %61 = vmatpush1.bf16.msra.mxu0 0
  %62 = vmatprep.subr.bf16.mxu0 0
  %63 = vmatpush1.bf16.msra.mxu0 0
  %64 = vmatprep.subr.bf16.mxu0 0
  %65 = vmatpush1.bf16.msra.mxu0 0
  %66 = vmatprep.subr.bf16.mxu0 0
  %67 = vmatpush1.bf16.msra.mxu0 0
  %68 = vmatprep.subr.bf16.mxu0 0
  %69 = vmatpush1.bf16.msra.mxu0 0
  %70 = vmatprep.subr.bf16.mxu0 0
  %71 = vmatpush1.bf16.msra.mxu0 0
  %72 = vmatprep.subr.bf16.mxu0 0
  %73 = vmatpush1.bf16.msra.mxu0 0
  %74 = vmatprep.subr.bf16.mxu0 0
  %75 = vmatpush1.bf16.msra.mxu0 0
  %76 = vmatprep.subr.bf16.mxu0 0
  %77 = vmatpush1.bf16.msra.mxu0 0
  %78 = vmatprep.subr.bf16.mxu0 0
  %79 = vmatpush1.bf16.msra.mxu0 0
  %80 = vmatprep.subr.bf16.mxu0 0
  %81 = vmatpush1.bf16.msra.mxu0 0
  %82 = vmatprep.mubr.bf16.mxu0 0
  %83 = vmatmul.mubr.bf16.gmra.mrb[0].mxu0 %v44
  %v84 = vpop.f32.mrb[0].mxu0
  %v85 = vadd.f32 %v25, %v84
  %v86 = vpop.f32.mrb[0].mxu0
  %v87 = vpop.f32.mrb[0].mxu0
  %v88 = vpop.f32.mrb[0].mxu0
  %89 = vdwg.mxu0
  %90 = vst [vmem:[%s3] sm:$0xff] %v85
  // Predicated region
  $region14: #{net6_forward.11} parent=0 // pred_check
    _
  $region15: #{net6_forward.11} parent=0 // pred_check_branch
    %92 = sbr.rel (0) target = $region17
  $region16: #{net6_forward.11} parent=0 // pred_region
    _
  $region17: #{net6_forward.11} parent=0 // pred_fallthru
    _
  // Predicated region
  $region18: #{net6_forward.11} parent=0 // pred_check
    _
  $region19: #{net6_forward.11} parent=0 // pred_check_branch
    %94 = sbr.rel (0) target = $region21
  $region20: #{net6_forward.11} parent=0 // pred_region
    _
  $region21: #{net6_forward.11} parent=0 // pred_fallthru
    _

</llo_original>
